<compile_context>
chip_gen: v7x
topology: tpu7x:2x2x1
jax: 0.10.0
libtpu: 0.0.40
codegen_flags: <defaults>
</compile_context>

<pallas_src>
import functools

import jax
import jax.numpy as jnp
from jax import lax
from jax.experimental import pallas as pl
from jax.experimental.pallas import tpu as pltpu

BN_EPS = 1e-5
LANE = 128


# ---------------------------------------------------------------------------
# Pallas kernels
# ---------------------------------------------------------------------------
def _conv_stats_kernel(p_ref, w_ref, y_ref, s_ref):
    # p_ref: (1, Ho*Wo, K)     bf16  im2col patches for one image
    # w_ref: (K, Cpad)         bf16  conv weights, channel-padded (resident)
    # y_ref: (1, Ho*Wo, Cpad)  f32   pre-BN conv output
    # s_ref: (1, 2, Cpad)      f32   per-image [sum, sum_of_squares] / channel
    y = jnp.dot(p_ref[0], w_ref[...], preferred_element_type=jnp.float32)
    y_ref[0] = y
    s_ref[0, 0:1, :] = jnp.sum(y, axis=0, keepdims=True)
    s_ref[0, 1:2, :] = jnp.sum(y * y, axis=0, keepdims=True)


def _bn_relu_pool_kernel(y_ref, scale_ref, shift_ref, o_ref):
    # y_ref:     (1, Hp, 2, Wp, 2*Cpad) f32  conv output, pool-friendly layout
    # scale_ref: (1, 1, Cpad)           f32  folded BN scale
    # shift_ref: (1, 1, Cpad)           f32  folded BN shift
    # o_ref:     (1, Hp, Wp, Cpad)      f32  pooled output
    cpad = o_ref.shape[-1]
    scale = scale_ref[...]          # (1, 1, Cpad) broadcasts over (Hp, Wp, Cpad)
    shift = shift_ref[...]

    def bn_relu(t):
        return jnp.maximum(t * scale + shift, 0.0)

    a = bn_relu(y_ref[0, :, 0, :, :cpad])    # row parity 0, col parity 0
    b = bn_relu(y_ref[0, :, 0, :, cpad:])    # row parity 0, col parity 1
    c = bn_relu(y_ref[0, :, 1, :, :cpad])    # row parity 1, col parity 0
    d = bn_relu(y_ref[0, :, 1, :, cpad:])    # row parity 1, col parity 1
    o_ref[0] = jnp.maximum(jnp.maximum(a, b), jnp.maximum(c, d))


# ---------------------------------------------------------------------------
# Wrapper
# ---------------------------------------------------------------------------
def relation_conv_block(x_nchw, conv_w, conv_b, gamma, beta, padding=0):
    """Forward pass of RelationConvBlock. x_nchw: (N, Cin, H, W) float32."""
    # Conv bias is cancelled exactly by training-mode BN mean subtraction.
    del conv_b

    x_nchw = x_nchw.astype(jnp.float32)
    N, Cin, H, W = x_nchw.shape
    Cout = conv_w.shape[0]

    if padding:
        x_nchw = jnp.pad(
            x_nchw, ((0, 0), (0, 0), (padding, padding), (padding, padding))
        )
        H += 2 * padding
        W += 2 * padding

    Ho, Wo = H - 2, W - 2            # 3x3 valid conv
    Hp, Wp = Ho // 2, Wo // 2        # MaxPool2d(2), floor mode
    K = 9 * Cin
    Cpad = ((Cout + LANE - 1) // LANE) * LANE   # lane-dense output channels
    M = N * Ho * Wo                  # true element count for BN stats

    # --- glue: NCHW -> NHWC (bf16) and im2col ------------------------------
    x = jnp.transpose(x_nchw, (0, 2, 3, 1)).astype(jnp.bfloat16)
    taps = [x[:, kh:kh + Ho, kw:kw + Wo, :] for kh in range(3) for kw in range(3)]
    patches = jnp.concatenate(taps, axis=-1).reshape(N, Ho * Wo, K)

    # PyTorch weight (Cout, Cin, kh, kw) -> (K, Cout) -> zero-pad to Cpad, bf16
    wmat = jnp.transpose(conv_w, (2, 3, 1, 0)).reshape(K, Cout).astype(jnp.float32)
    wmat = jnp.pad(wmat, ((0, 0), (0, Cpad - Cout))).astype(jnp.bfloat16)

    cparams = pltpu.CompilerParams(
        dimension_semantics=("parallel",),
        vmem_limit_bytes=32 * 1024 * 1024,
    )

    # --- pass 1: conv matmul + per-image BN stat partials -------------------
    y, stats = pl.pallas_call(
        _conv_stats_kernel,
        grid=(N,),
        in_specs=[
            pl.BlockSpec((1, Ho * Wo, K), lambda n: (n, 0, 0)),
            pl.BlockSpec((K, Cpad), lambda n: (0, 0)),
        ],
        out_specs=(
            pl.BlockSpec((1, Ho * Wo, Cpad), lambda n: (n, 0, 0)),
            pl.BlockSpec((1, 2, Cpad), lambda n: (n, 0, 0)),
        ),
        out_shape=(
            jax.ShapeDtypeStruct((N, Ho * Wo, Cpad), jnp.float32),
            jax.ShapeDtypeStruct((N, 2, Cpad), jnp.float32),
        ),
        compiler_params=cparams,
    )(patches, wmat)

    # --- glue: reduce stats, fold BN affine into scale/shift ----------------
    gpad = jnp.pad(gamma.astype(jnp.float32), (0, Cpad - Cout))
    bpad = jnp.pad(beta.astype(jnp.float32), (0, Cpad - Cout))
    s = jnp.sum(stats, axis=0)                       # (2, Cpad)
    mean = s[0] / M
    var = jnp.maximum(s[1] / M - mean * mean, 0.0)   # biased batch variance
    scale = gpad * lax.rsqrt(var + BN_EPS)
    shift = bpad - mean * scale
    scale = scale.reshape(1, 1, Cpad)
    shift = shift.reshape(1, 1, Cpad)

    # --- glue: free re-view into pool-friendly layout ------------------------
    y = y.reshape(N, Ho, Wo, Cpad)[:, :2 * Hp, :2 * Wp, :]
    y4 = y.reshape(N, Hp, 2, Wp, 2 * Cpad)

    # --- pass 2: fused BN-apply + ReLU + 2x2 max-pool ------------------------
    pooled = pl.pallas_call(
        _bn_relu_pool_kernel,
        grid=(N,),
        in_specs=[
            pl.BlockSpec((1, Hp, 2, Wp, 2 * Cpad), lambda n: (n, 0, 0, 0, 0)),
            pl.BlockSpec((1, 1, Cpad), lambda n: (0, 0, 0)),
            pl.BlockSpec((1, 1, Cpad), lambda n: (0, 0, 0)),
        ],
        out_specs=pl.BlockSpec((1, Hp, Wp, Cpad), lambda n: (n, 0, 0, 0)),
        out_shape=jax.ShapeDtypeStruct((N, Hp, Wp, Cpad), jnp.float32),
        compiler_params=cparams,
    )(y4, scale, shift)

    # slice away padded channels, back to NCHW
    return jnp.transpose(pooled[..., :Cout], (0, 3, 1, 2))


# ---------------------------------------------------------------------------
# Pure-JAX reference (for a correctness sanity check)
# ---------------------------------------------------------------------------
def reference(x, conv_w, conv_b, gamma, beta, padding=0):
    y = lax.conv_general_dilated(
        x.astype(jnp.float32),
        conv_w.astype(jnp.float32),
        window_strides=(1, 1),
        padding=[(padding, padding), (padding, padding)],
        dimension_numbers=("NCHW", "OIHW", "NCHW"),
        precision=lax.Precision.HIGHEST,
    )
    y = y + conv_b.reshape(1, -1, 1, 1)
    mean = jnp.mean(y, axis=(0, 2, 3), keepdims=True)
    var = jnp.mean((y - mean) ** 2, axis=(0, 2, 3), keepdims=True)
    y = (y - mean) * lax.rsqrt(var + BN_EPS)
    y = y * gamma.reshape(1, -1, 1, 1) + beta.reshape(1, -1, 1, 1)
    y = jnp.maximum(y, 0.0)
    N, C, H, W = y.shape
    y = y[:, :, : H // 2 * 2, : W // 2 * 2].reshape(N, C, H // 2, 2, W // 2, 2)
    return jnp.max(y, axis=(3, 5))


# ---------------------------------------------------------------------------
if __name__ == "__main__":
    key = jax.random.PRNGKey(0)
    k_x, k_w, k_b, k_g, k_be = jax.random.split(key, 5)

    N, Cin, H, W = 2, 4, 16, 16
    Cout = 8
    padding = 0

    x = jax.random.normal(k_x, (N, Cin, H, W), dtype=jnp.float32)
    fan_in = Cin * 3 * 3
    conv_w = jax.random.normal(k_w, (Cout, Cin, 3, 3), dtype=jnp.float32) * jnp.sqrt(
        2.0 / fan_in
    )
    conv_b = jax.random.normal(k_b, (Cout,), dtype=jnp.float32) * 0.1
    gamma = 1.0 + 0.1 * jax.random.normal(k_g, (Cout,), dtype=jnp.float32)
    beta = 0.1 * jax.random.normal(k_be, (Cout,), dtype=jnp.float32)

    fwd = jax.jit(functools.partial(relation_conv_block, padding=padding))
    out = jax.block_until_ready(fwd(x, conv_w, conv_b, gamma, beta))

    ref = jax.block_until_ready(reference(x, conv_w, conv_b, gamma, beta, padding))
    assert out.shape == ref.shape, (out.shape, ref.shape)
    # bf16 matmul inputs (f32 accumulate) -> slightly looser tolerance vs f32 ref
    max_err = float(jnp.max(jnp.abs(out - ref)))
    assert max_err < 3e-2, f"max abs error {max_err}"

    print("KERNEL_OK")
</pallas_src>

<mosaic_0001>
module attributes {stable_mosaic.version = 11 : i64} {
  func.func @_conv_stats_kernel(%arg0: i32, %arg1: memref<1x196x36xbf16, #tpu.memory_space<vmem>>, %arg2: memref<36x128xbf16, #tpu.memory_space<vmem>>, %arg3: memref<1x196x128xf32, #tpu.memory_space<vmem>>, %arg4: memref<1x2x128xf32, #tpu.memory_space<vmem>>) attributes {dimension_semantics = [#tpu.dimension_semantics<parallel>], iteration_bounds = array<i64: 2>, scalar_prefetch = 0 : i64, scratch_operands = 0 : i64, tpu.core_type = #tpu.core_type<tc>, window_params = [{transform_indices = @transform_0, window_bounds = array<i64: 1, 196, 36>}, {pipeline_mode = #tpu.pipeline_mode<synchronous>, transform_indices = @transform_1, window_bounds = array<i64: 36, 128>}, {transform_indices = @transform_2, window_bounds = array<i64: 1, 196, 128>}, {transform_indices = @transform_3, window_bounds = array<i64: 1, 2, 128>}]} {
    %c0 = arith.constant 0 : index
    %c0_0 = arith.constant 0 : index
    %c0_1 = arith.constant 0 : index
    %0 = vector.load %arg1[%c0, %c0_0, %c0_1] : memref<1x196x36xbf16, #tpu.memory_space<vmem>>, vector<1x196x36xbf16>
    %1 = vector.shape_cast %0 : vector<1x196x36xbf16> to vector<196x36xbf16>
    %c0_2 = arith.constant 0 : index
    %c0_3 = arith.constant 0 : index
    %2 = vector.load %arg2[%c0_2, %c0_3] : memref<36x128xbf16, #tpu.memory_space<vmem>>, vector<36x128xbf16>
    %cst = arith.constant dense<0.000000e+00> : vector<196x128xf32>
    %3 = tpu.matmul %1, %2, %cst {dimension_numbers = #tpu.dot_dimension_numbers<[1], [0], [0], [1], [0, 0, 1, 1], [], []>} : vector<196x36xbf16>, vector<36x128xbf16>, vector<196x128xf32> -> vector<196x128xf32>
    %c0_4 = arith.constant 0 : index
    %c0_5 = arith.constant 0 : index
    %c0_6 = arith.constant 0 : index
    %4 = vector.load %arg3[%c0_4, %c0_5, %c0_6] : memref<1x196x128xf32, #tpu.memory_space<vmem>>, vector<1x196x128xf32>
    %5 = vector.shape_cast %4 : vector<1x196x128xf32> to vector<196x128xf32>
    %6 = vector.shape_cast %3 : vector<196x128xf32> to vector<1x196x128xf32>
    tpu.vector_store %arg3[%c0_4, %c0_5, %c0_6], %6 {strides = array<i32>} : memref<1x196x128xf32, #tpu.memory_space<vmem>>, vector<1x196x128xf32>,
    %cst_7 = arith.constant dense<0.000000e+00> : vector<128xf32>
    %7 = vector.multi_reduction <add>, %3, %cst_7 [0] : vector<196x128xf32> to vector<128xf32>
    %8 = vector.shape_cast %7 : vector<128xf32> to vector<1x128xf32>
    %c0_8 = arith.constant 0 : index
    %c0_9 = arith.constant 0 : index
    %c0_10 = arith.constant 0 : index
    %9 = vector.load %arg4[%c0_8, %c0_9, %c0_10] : memref<1x2x128xf32, #tpu.memory_space<vmem>>, vector<1x1x128xf32>
    %10 = vector.shape_cast %9 : vector<1x1x128xf32> to vector<1x128xf32>
    %11 = vector.shape_cast %8 : vector<1x128xf32> to vector<1x1x128xf32>
    tpu.vector_store %arg4[%c0_8, %c0_9, %c0_10], %11 {strides = array<i32>} : memref<1x2x128xf32, #tpu.memory_space<vmem>>, vector<1x1x128xf32>,
    %12 = arith.mulf %3, %3 : vector<196x128xf32>
    %cst_11 = arith.constant dense<0.000000e+00> : vector<128xf32>
    %13 = vector.multi_reduction <add>, %12, %cst_11 [0] : vector<196x128xf32> to vector<128xf32>
    %14 = vector.shape_cast %13 : vector<128xf32> to vector<1x128xf32>
    %c0_12 = arith.constant 0 : index
    %c1 = arith.constant 1 : index
    %c0_13 = arith.constant 0 : index
    %15 = vector.load %arg4[%c0_12, %c1, %c0_13] : memref<1x2x128xf32, #tpu.memory_space<vmem>>, vector<1x1x128xf32>
    %16 = vector.shape_cast %15 : vector<1x1x128xf32> to vector<1x128xf32>
    %17 = vector.shape_cast %14 : vector<1x128xf32> to vector<1x1x128xf32>
    tpu.vector_store %arg4[%c0_12, %c1, %c0_13], %17 {strides = array<i32>} : memref<1x2x128xf32, #tpu.memory_space<vmem>>, vector<1x1x128xf32>,
    return
  }
  func.func @transform_0(%arg0: i32) -> (i32, i32, i32) {
    %c0_i32 = arith.constant 0 : i32
    %c0_i32_0 = arith.constant 0 : i32
    %c0_i32_1 = arith.constant 0 : i32
    return %arg0, %c0_i32, %c0_i32_0 : i32, i32, i32
  }
  func.func @transform_1(%arg0: i32) -> (i32, i32) {
    %c0_i32 = arith.constant 0 : i32
    %c0_i32_0 = arith.constant 0 : i32
    %c0_i32_1 = arith.constant 0 : i32
    return %c0_i32, %c0_i32_0 : i32, i32
  }
  func.func @transform_2(%arg0: i32) -> (i32, i32, i32) {
    %c0_i32 = arith.constant 0 : i32
    %c0_i32_0 = arith.constant 0 : i32
    %c0_i32_1 = arith.constant 0 : i32
    return %arg0, %c0_i32, %c0_i32_0 : i32, i32, i32
  }
  func.func @transform_3(%arg0: i32) -> (i32, i32, i32) {
    %c0_i32 = arith.constant 0 : i32
    %c0_i32_0 = arith.constant 0 : i32
    %c0_i32_1 = arith.constant 0 : i32
    return %arg0, %c0_i32, %c0_i32_0 : i32, i32, i32
  }
}

module attributes {stable_mosaic.version = 11 : i64} {
  func.func @_bn_relu_pool_kernel(%arg0: i32, %arg1: memref<1x7x2x7x256xf32, #tpu.memory_space<vmem>>, %arg2: memref<1x1x128xf32, #tpu.memory_space<vmem>>, %arg3: memref<1x1x128xf32, #tpu.memory_space<vmem>>, %arg4: memref<1x7x7x128xf32, #tpu.memory_space<vmem>>) attributes {dimension_semantics = [#tpu.dimension_semantics<parallel>], iteration_bounds = array<i64: 2>, scalar_prefetch = 0 : i64, scratch_operands = 0 : i64, tpu.core_type = #tpu.core_type<tc>, window_params = [{transform_indices = @transform_0, window_bounds = array<i64: 1, 7, 2, 7, 256>}, {pipeline_mode = #tpu.pipeline_mode<synchronous>, transform_indices = @transform_1, window_bounds = array<i64: 1, 1, 128>}, {pipeline_mode = #tpu.pipeline_mode<synchronous>, transform_indices = @transform_2, window_bounds = array<i64: 1, 1, 128>}, {transform_indices = @transform_3, window_bounds = array<i64: 1, 7, 7, 128>}]} {
    %c0 = arith.constant 0 : index
    %c0_0 = arith.constant 0 : index
    %c0_1 = arith.constant 0 : index
    %0 = vector.load %arg2[%c0, %c0_0, %c0_1] : memref<1x1x128xf32, #tpu.memory_space<vmem>>, vector<1x1x128xf32>
    %c0_2 = arith.constant 0 : index
    %c0_3 = arith.constant 0 : index
    %c0_4 = arith.constant 0 : index
    %1 = vector.load %arg3[%c0_2, %c0_3, %c0_4] : memref<1x1x128xf32, #tpu.memory_space<vmem>>, vector<1x1x128xf32>
    %c0_5 = arith.constant 0 : index
    %c0_6 = arith.constant 0 : index
    %c0_7 = arith.constant 0 : index
    %c0_8 = arith.constant 0 : index
    %c0_9 = arith.constant 0 : index
    %2 = vector.load %arg1[%c0_5, %c0_6, %c0_7, %c0_8, %c0_9] : memref<1x7x2x7x256xf32, #tpu.memory_space<vmem>>, vector<1x7x1x7x128xf32>
    %3 = vector.shape_cast %2 : vector<1x7x1x7x128xf32> to vector<7x7x128xf32>
    %4 = vector.broadcast %0 : vector<1x1x128xf32> to vector<7x7x128xf32>
    %5 = arith.mulf %3, %4 : vector<7x7x128xf32>
    %6 = vector.broadcast %1 : vector<1x1x128xf32> to vector<7x7x128xf32>
    %7 = arith.addf %5, %6 : vector<7x7x128xf32>
    %cst = arith.constant 0.000000e+00 : f32
    %8 = vector.broadcast %cst : f32 to vector<7x7x128xf32>
    %9 = arith.maximumf %7, %8 : vector<7x7x128xf32>
    %c0_10 = arith.constant 0 : index
    %c0_11 = arith.constant 0 : index
    %c0_12 = arith.constant 0 : index
    %c0_13 = arith.constant 0 : index
    %c128 = arith.constant 128 : index
    %10 = vector.load %arg1[%c0_10, %c0_11, %c0_12, %c0_13, %c128] : memref<1x7x2x7x256xf32, #tpu.memory_space<vmem>>, vector<1x7x1x7x128xf32>
    %11 = vector.shape_cast %10 : vector<1x7x1x7x128xf32> to vector<7x7x128xf32>
    %12 = vector.broadcast %0 : vector<1x1x128xf32> to vector<7x7x128xf32>
    %13 = arith.mulf %11, %12 : vector<7x7x128xf32>
    %14 = vector.broadcast %1 : vector<1x1x128xf32> to vector<7x7x128xf32>
    %15 = arith.addf %13, %14 : vector<7x7x128xf32>
    %cst_14 = arith.constant 0.000000e+00 : f32
    %16 = vector.broadcast %cst_14 : f32 to vector<7x7x128xf32>
    %17 = arith.maximumf %15, %16 : vector<7x7x128xf32>
    %c0_15 = arith.constant 0 : index
    %c0_16 = arith.constant 0 : index
    %c1 = arith.constant 1 : index
    %c0_17 = arith.constant 0 : index
    %c0_18 = arith.constant 0 : index
    %18 = vector.load %arg1[%c0_15, %c0_16, %c1, %c0_17, %c0_18] : memref<1x7x2x7x256xf32, #tpu.memory_space<vmem>>, vector<1x7x1x7x128xf32>
    %19 = vector.shape_cast %18 : vector<1x7x1x7x128xf32> to vector<7x7x128xf32>
    %20 = vector.broadcast %0 : vector<1x1x128xf32> to vector<7x7x128xf32>
    %21 = arith.mulf %19, %20 : vector<7x7x128xf32>
    %22 = vector.broadcast %1 : vector<1x1x128xf32> to vector<7x7x128xf32>
    %23 = arith.addf %21, %22 : vector<7x7x128xf32>
    %cst_19 = arith.constant 0.000000e+00 : f32
    %24 = vector.broadcast %cst_19 : f32 to vector<7x7x128xf32>
    %25 = arith.maximumf %23, %24 : vector<7x7x128xf32>
    %c0_20 = arith.constant 0 : index
    %c0_21 = arith.constant 0 : index
    %c1_22 = arith.constant 1 : index
    %c0_23 = arith.constant 0 : index
    %c128_24 = arith.constant 128 : index
    %26 = vector.load %arg1[%c0_20, %c0_21, %c1_22, %c0_23, %c128_24] : memref<1x7x2x7x256xf32, #tpu.memory_space<vmem>>, vector<1x7x1x7x128xf32>
    %27 = vector.shape_cast %26 : vector<1x7x1x7x128xf32> to vector<7x7x128xf32>
    %28 = vector.broadcast %0 : vector<1x1x128xf32> to vector<7x7x128xf32>
    %29 = arith.mulf %27, %28 : vector<7x7x128xf32>
    %30 = vector.broadcast %1 : vector<1x1x128xf32> to vector<7x7x128xf32>
    %31 = arith.addf %29, %30 : vector<7x7x128xf32>
    %cst_25 = arith.constant 0.000000e+00 : f32
    %32 = vector.broadcast %cst_25 : f32 to vector<7x7x128xf32>
    %33 = arith.maximumf %31, %32 : vector<7x7x128xf32>
    %34 = arith.maximumf %9, %17 : vector<7x7x128xf32>
    %35 = arith.maximumf %25, %33 : vector<7x7x128xf32>
    %36 = arith.maximumf %34, %35 : vector<7x7x128xf32>
    %c0_26 = arith.constant 0 : index
    %c0_27 = arith.constant 0 : index
    %c0_28 = arith.constant 0 : index
    %c0_29 = arith.constant 0 : index
    %37 = vector.load %arg4[%c0_26, %c0_27, %c0_28, %c0_29] : memref<1x7x7x128xf32, #tpu.memory_space<vmem>>, vector<1x7x7x128xf32>
    %38 = vector.shape_cast %37 : vector<1x7x7x128xf32> to vector<7x7x128xf32>
    %39 = vector.shape_cast %36 : vector<7x7x128xf32> to vector<1x7x7x128xf32>
    tpu.vector_store %arg4[%c0_26, %c0_27, %c0_28, %c0_29], %39 {strides = array<i32>} : memref<1x7x7x128xf32, #tpu.memory_space<vmem>>, vector<1x7x7x128xf32>,
    return
  }
  func.func @transform_0(%arg0: i32) -> (i32, i32, i32, i32, i32) {
    %c0_i32 = arith.constant 0 : i32
    %c0_i32_0 = arith.constant 0 : i32
    %c0_i32_1 = arith.constant 0 : i32
    %c0_i32_2 = arith.constant 0 : i32
    %c0_i32_3 = arith.constant 0 : i32
    return %arg0, %c0_i32, %c0_i32_0, %c0_i32_1, %c0_i32_2 : i32, i32, i32, i32, i32
  }
  func.func @transform_1(%arg0: i32) -> (i32, i32, i32) {
    %c0_i32 = arith.constant 0 : i32
    %c0_i32_0 = arith.constant 0 : i32
    %c0_i32_1 = arith.constant 0 : i32
    %c0_i32_2 = arith.constant 0 : i32
    return %c0_i32, %c0_i32_0, %c0_i32_1 : i32, i32, i32
  }
  func.func @transform_2(%arg0: i32) -> (i32, i32, i32) {
    %c0_i32 = arith.constant 0 : i32
    %c0_i32_0 = arith.constant 0 : i32
    %c0_i32_1 = arith.constant 0 : i32
    %c0_i32_2 = arith.constant 0 : i32
    return %c0_i32, %c0_i32_0, %c0_i32_1 : i32, i32, i32
  }
  func.func @transform_3(%arg0: i32) -> (i32, i32, i32, i32) {
    %c0_i32 = arith.constant 0 : i32
    %c0_i32_0 = arith.constant 0 : i32
    %c0_i32_1 = arith.constant 0 : i32
    %c0_i32_2 = arith.constant 0 : i32
    return %arg0, %c0_i32, %c0_i32_0, %c0_i32_1 : i32, i32, i32, i32
  }
}

</mosaic_0001>

<llo_original>
// kernel: relation_conv_block.3
$region0: #{relation_conv_block.3}
  #allocation0 [shape = 'u32[]', space=smem, size = 0x4, offset = 0x4, fixed_abs, tag = 'smem constant byte address 0x4 - core index']
  #allocation1 [shape = 'u32[144,128]{1,0:T(1,128)}', space=vmem, size = 0x12000, scoped, tag = 'internal scratch']
  %s0 = inlined_call_operand.vmem [shape: f32[2,7,2,7,256], index: 0, kind: input, shape index: {}]
  %s1 = inlined_call_operand.vmem [shape: f32[1,1,128], index: 1, kind: input, shape index: {}]
  %s2 = inlined_call_operand.vmem [shape: f32[1,1,128], index: 2, kind: input, shape index: {}]
  %s3 = inlined_call_operand.vmem [shape: f32[2,7,7,128], index: 3, kind: output, shape index: {}]
  %s4 = sld [smem:[#allocation0]]
  $region45: #{relation_conv_block.3} parent=0
    _
  %s6 = ssub.s32 1, %s4
  %s7 = scalar_select 0, %s6, %s4
  loop: start=0, step=1, limit=4
  $region2: #{relation_conv_block.3} parent=0 // loop_pre_header
    _
  $region3: #{relation_conv_block.3} parent=0 // loop_header
    %s9 = sphi 0, %s13
    %p10 = scmp.ge.s32.totalorder %s9, 4
    %s19 = sphi 0, %s21
    %s22 = sphi 0, %s19
    %s23 = sphi 0, %s22
    %s39 = sphi 0, %s23
    %s43 = sphi 0, %s43
    %s45 = sphi 0, %s43
    %s46 = sphi 0, %s45
    %s60 = sphi 0, %s46
    %s64 = sphi 0, %s64
    %s66 = sphi 0, %s64
    %s67 = sphi 0, %s66
    %s81 = sphi 0, %s67
    %s87 = sphi 0, %s89
    %s90 = sphi 0, %s87
    %s91 = sphi 0, %s90
    %s107 = sphi 0, %s91
  $region4: #{relation_conv_block.3} parent=0 // loop_header_branch
    %12 = sbr.rel (%p10) target = $region8
  $region5: #{relation_conv_block.3} parent=0 // loop_body
    %s14 = ssub.s32 %s9, 1
    %s15 = ssub.s32 %s9, 2
    %s16 = sadd.s32 %s9, 1
    %s17 = ssub.s32 %s9, %s16
    %p18 = scmp.eq.s32.totalorder %s17, 0
    %s20 = sadd.s32 %s19, 1
    %s21 = scalar_select %p18, %s19, %s20
    %p24 = pneg %p18
    %p25 = scmp.eq.s32.totalorder %s9, 1
    %p26 = por %p24, %p25
    %p27 = scmp.ne.s32.totalorder %s19, %s22
    %p28 = scmp.eq.s32.totalorder %s9, 0
    %p29 = por %p27, %p28
    %p30 = scmp.ne.s32.totalorder %s19, %s22
    %p31 = scmp.eq.s32.totalorder %s14, 1
    %p32 = por %p30, %p31
    %p33 = scmp.ne.s32.totalorder %s22, %s23
    %p34 = scmp.eq.s32.totalorder %s14, 0
    %p35 = por %p33, %p34
    %p36 = scmp.ne.s32.totalorder %s22, %s23
    %p37 = scmp.eq.s32.totalorder %s15, 1
    %p38 = por %p36, %p37
    %p40 = scmp.ne.s32.totalorder %s23, %s39
    %p41 = scmp.eq.s32.totalorder %s15, 0
    %p42 = por %p40, %p41
    %s44 = sadd.s32 %s43, 1
    %p47 = scmp.eq.s32.totalorder %s9, 1
    %p48 = scmp.ne.s32.totalorder %s43, %s45
    %p49 = scmp.eq.s32.totalorder %s9, 0
    %p50 = por %p48, %p49
    %p51 = scmp.ne.s32.totalorder %s43, %s45
    %p52 = scmp.eq.s32.totalorder %s14, 1
    %p53 = por %p51, %p52
    %p54 = scmp.ne.s32.totalorder %s45, %s46
    %p55 = scmp.eq.s32.totalorder %s14, 0
    %p56 = por %p54, %p55
    %p57 = scmp.ne.s32.totalorder %s45, %s46
    %p58 = scmp.eq.s32.totalorder %s15, 1
    %p59 = por %p57, %p58
    %p61 = scmp.ne.s32.totalorder %s46, %s60
    %p62 = scmp.eq.s32.totalorder %s15, 0
    %p63 = por %p61, %p62
    %s65 = sadd.s32 %s64, 1
    %p68 = scmp.eq.s32.totalorder %s9, 1
    %p69 = scmp.ne.s32.totalorder %s64, %s66
    %p70 = scmp.eq.s32.totalorder %s9, 0
    %p71 = por %p69, %p70
    %p72 = scmp.ne.s32.totalorder %s64, %s66
    %p73 = scmp.eq.s32.totalorder %s14, 1
    %p74 = por %p72, %p73
    %p75 = scmp.ne.s32.totalorder %s66, %s67
    %p76 = scmp.eq.s32.totalorder %s14, 0
    %p77 = por %p75, %p76
    %p78 = scmp.ne.s32.totalorder %s66, %s67
    %p79 = scmp.eq.s32.totalorder %s15, 1
    %p80 = por %p78, %p79
    %p82 = scmp.ne.s32.totalorder %s67, %s81
    %p83 = scmp.eq.s32.totalorder %s15, 0
    %p84 = por %p82, %p83
    %s85 = ssub.s32 %s9, %s16
    %p86 = scmp.eq.s32.totalorder %s85, 0
    %s88 = sadd.s32 %s87, 1
    %s89 = scalar_select %p86, %s87, %s88
    %p92 = pneg %p86
    %p93 = scmp.eq.s32.totalorder %s9, 1
    %p94 = por %p92, %p93
    %p95 = scmp.ne.s32.totalorder %s87, %s90
    %p96 = scmp.eq.s32.totalorder %s9, 0
    %p97 = por %p95, %p96
    %p98 = scmp.ne.s32.totalorder %s87, %s90
    %p99 = scmp.eq.s32.totalorder %s14, 1
    %p100 = por %p98, %p99
    %p101 = scmp.ne.s32.totalorder %s90, %s91
    %p102 = scmp.eq.s32.totalorder %s14, 0
    %p103 = por %p101, %p102
    %p104 = scmp.ne.s32.totalorder %s90, %s91
    %p105 = scmp.eq.s32.totalorder %s15, 1
    %p106 = por %p104, %p105
    %p108 = scmp.ne.s32.totalorder %s91, %s107
    %p109 = scmp.eq.s32.totalorder %s15, 0
    %p110 = por %p108, %p109
    %p111 = scmp.le.s32.totalorder 1, %s9
    %p112 = scmp.lt.s32.totalorder %s9, 3
    %p113 = pnand %p111, %p112
    %p114 = pneg %p113
    // Predicated region
    $region9: #{relation_conv_block.3} parent=5 // pred_check
      _
    $region10: #{relation_conv_block.3} parent=5 // pred_check_branch
      %116 = sbr.rel (%p113) target = $region12
    $region11: #{relation_conv_block.3} parent=5 // pred_region
      %s117 = ssub.s32 %s9, 1
      // Predicated region
      $region13: #{relation_conv_block.3} parent=11 // pred_check
        %p118 = pneg %p56
      $region14: #{relation_conv_block.3} parent=11 // pred_check_branch
        %120 = sbr.rel (%p118) target = $region16
      $region15: #{relation_conv_block.3} parent=11 // pred_region
        _
      $region16: #{relation_conv_block.3} parent=11 // pred_fallthru
        _
      // Predicated region
      $region17: #{relation_conv_block.3} parent=11 // pred_check
        %p121 = pneg %p77
      $region18: #{relation_conv_block.3} parent=11 // pred_check_branch
        %123 = sbr.rel (%p121) target = $region20
      $region19: #{relation_conv_block.3} parent=11 // pred_region
        _
      $region20: #{relation_conv_block.3} parent=11 // pred_fallthru
        _
    $region12: #{relation_conv_block.3} parent=5 // pred_fallthru
      _
    %p124 = scmp.lt.s32.totalorder %s9, 2
    // Predicated region
    $region21: #{relation_conv_block.3} parent=5 // pred_check
      %p125 = pneg %p124
    $region22: #{relation_conv_block.3} parent=5 // pred_check_branch
      %127 = sbr.rel (%p125) target = $region24
    $region23: #{relation_conv_block.3} parent=5 // pred_region
      // Predicated region
      $region25: #{relation_conv_block.3} parent=23 // pred_check
        %p128 = pneg %p29
      $region26: #{relation_conv_block.3} parent=23 // pred_check_branch
        %130 = sbr.rel (%p128) target = $region28
      $region27: #{relation_conv_block.3} parent=23 // pred_region
        %p131 = scmp.lt.s32.totalorder %s9, 1
        %s132 = scalar_select %p131, %s9, 1
        %s133 = smul.addr %s132, 28
        %s134 = smul.addr %s133, 8
        %s135 = scalar_lea.vmem %s0, %s134
      $region28: #{relation_conv_block.3} parent=23 // pred_fallthru
        _
    $region24: #{relation_conv_block.3} parent=5 // pred_fallthru
      _
    %p136 = scmp.le.s32.totalorder 1, %s9
    %p137 = scmp.lt.s32.totalorder %s9, 3
    %p138 = pnand %p136, %p137
    %p139 = pneg %p138
    // Predicated region
    $region29: #{relation_conv_block.3} parent=5 // pred_check
      _
    $region30: #{relation_conv_block.3} parent=5 // pred_check_branch
      %141 = sbr.rel (%p138) target = $region32
    $region31: #{relation_conv_block.3} parent=5 // pred_region
      %s142 = ssub.s32 %s9, 1
      %p143 = scmp.lt.s32.totalorder %s14, 1
      %s144 = scalar_select %p143, %s14, 1
      %s145 = smul.addr %s144, 28
      %s146 = smul.addr %s145, 8
      %s147 = scalar_lea.vmem %s0, %s146
      %p148 = pneg %p35
      %p149 = pneg %p32
      %p150 = pneg %p56
      %p151 = pneg %p53
      %p152 = pneg %p77
      %p153 = pneg %p74
      %p154 = pneg %p103
      %p155 = pneg %p100
      %p156 = scmp.lt.s32.totalorder %s14, 1
      %s157 = scalar_select %p156, %s14, 1
      %s158 = smul.addr %s157, 7
      %s159 = smul.addr %s158, 8
      %s160 = scalar_lea.vmem %s3, %s159
      %p161 = scmp.lt.s32.totalorder %s14, 1
      %s162 = scalar_select %p161, %s14, 1
      %s163 = smul.addr %s162, 28
      %s164 = smul.addr %s163, 8
      %s165 = scalar_lea.vmem %s0, %s164
      %p166 = scmp.lt.s32.totalorder %s14, 1
      %s167 = scalar_select %p166, %s14, 1
      %s168 = smul.addr %s167, 7
      %s169 = smul.addr %s168, 8
      %s170 = scalar_lea.vmem %s3, %s169
      %v171 = vld [vmem:[%s1] sm:$0x1]
      %v172 = vld [vmem:[%s2] sm:$0x1]
      %v173 = vld [vmem:[%s165] sm:$0x7f]
      %v174 = vld [vmem:[%s165 + $0x20] sm:$0x7f]
      %v175 = vld [vmem:[%s165 + $0x40] sm:$0x7f]
      %v176 = vld [vmem:[%s165 + $0x60] sm:$0x7f]
      %v177 = vld [vmem:[%s165 + $0x80] sm:$0x7f]
      %v178 = vld [vmem:[%s165 + $0xa0] sm:$0x7f]
      %v179 = vld [vmem:[%s165 + $0xc0] sm:$0x7f]
      %v181 = vlaneseq
      %v182 = vshrl.u32 %v181, 7
      %v183 = vsub.s32 0, %v182
      %v184 = vrot.slane %v171, %v183
      %v186 = vmul.f32 %v173, %v184
      %v187 = vmul.f32 %v174, %v184
      %v188 = vmul.f32 %v175, %v184
      %v189 = vmul.f32 %v176, %v184
      %v190 = vmul.f32 %v177, %v184
      %v191 = vmul.f32 %v178, %v184
      %v192 = vmul.f32 %v179, %v184
      %v194 = vlaneseq
      %v195 = vshrl.u32 %v194, 7
      %v196 = vsub.s32 0, %v195
      %v197 = vrot.slane %v172, %v196
      %v199 = vadd.f32 %v186, %v197
      %v200 = vadd.f32 %v187, %v197
      %v201 = vadd.f32 %v188, %v197
      %v202 = vadd.f32 %v189, %v197
      %v203 = vadd.f32 %v190, %v197
      %v204 = vadd.f32 %v191, %v197
      %v205 = vadd.f32 %v192, %v197
      %v206 = vmax.f32 %v199, 0.0
      %v207 = vmax.f32 %v200, 0.0
      %v208 = vmax.f32 %v201, 0.0
      %v209 = vmax.f32 %v202, 0.0
      %v210 = vmax.f32 %v203, 0.0
      %v211 = vmax.f32 %v204, 0.0
      %v212 = vmax.f32 %v205, 0.0
      %v213 = vld [vmem:[%s165 + $0x8] sm:$0x7f]
      %v214 = vld [vmem:[%s165 + $0x28] sm:$0x7f]
      %v215 = vld [vmem:[%s165 + $0x48] sm:$0x7f]
      %v216 = vld [vmem:[%s165 + $0x68] sm:$0x7f]
      %v217 = vld [vmem:[%s165 + $0x88] sm:$0x7f]
      %v218 = vld [vmem:[%s165 + $0xa8] sm:$0x7f]
      %v219 = vld [vmem:[%s165 + $0xc8] sm:$0x7f]
      %v220 = vmul.f32 %v213, %v184
      %v221 = vmul.f32 %v214, %v184
      %v222 = vmul.f32 %v215, %v184
      %v223 = vmul.f32 %v216, %v184
      %v224 = vmul.f32 %v217, %v184
      %v225 = vmul.f32 %v218, %v184
      %v226 = vmul.f32 %v219, %v184
      %v227 = vadd.f32 %v220, %v197
      %v228 = vadd.f32 %v221, %v197
      %v229 = vadd.f32 %v222, %v197
      %v230 = vadd.f32 %v223, %v197
      %v231 = vadd.f32 %v224, %v197
      %v232 = vadd.f32 %v225, %v197
      %v233 = vadd.f32 %v226, %v197
      %v234 = vmax.f32 %v227, 0.0
      %v235 = vmax.f32 %v228, 0.0
      %v236 = vmax.f32 %v229, 0.0
      %v237 = vmax.f32 %v230, 0.0
      %v238 = vmax.f32 %v231, 0.0
      %v239 = vmax.f32 %v232, 0.0
      %v240 = vmax.f32 %v233, 0.0
      %s241 = scalar_lea.vmem %s165, 16
      %v242 = vld [vmem:[%s241] sm:$0x7f]
      %v243 = vld [vmem:[%s241 + $0x20] sm:$0x7f]
      %v244 = vld [vmem:[%s241 + $0x40] sm:$0x7f]
      %v245 = vld [vmem:[%s241 + $0x60] sm:$0x7f]
      %v246 = vld [vmem:[%s241 + $0x80] sm:$0x7f]
      %v247 = vld [vmem:[%s241 + $0xa0] sm:$0x7f]
      %v248 = vld [vmem:[%s241 + $0xc0] sm:$0x7f]
      %v249 = vmul.f32 %v242, %v184
      %v250 = vmul.f32 %v243, %v184
      %v251 = vmul.f32 %v244, %v184
      %v252 = vmul.f32 %v245, %v184
      %v253 = vmul.f32 %v246, %v184
      %v254 = vmul.f32 %v247, %v184
      %v255 = vmul.f32 %v248, %v184
      %v256 = vadd.f32 %v249, %v197
      %v257 = vadd.f32 %v250, %v197
      %v258 = vadd.f32 %v251, %v197
      %v259 = vadd.f32 %v252, %v197
      %v260 = vadd.f32 %v253, %v197
      %v261 = vadd.f32 %v254, %v197
      %v262 = vadd.f32 %v255, %v197
      %v263 = vmax.f32 %v256, 0.0
      %v264 = vmax.f32 %v257, 0.0
      %v265 = vmax.f32 %v258, 0.0
      %v266 = vmax.f32 %v259, 0.0
      %v267 = vmax.f32 %v260, 0.0
      %v268 = vmax.f32 %v261, 0.0
      %v269 = vmax.f32 %v262, 0.0
      %v270 = vld [vmem:[%s241 + $0x8] sm:$0x7f]
      %v271 = vld [vmem:[%s241 + $0x28] sm:$0x7f]
      %v272 = vld [vmem:[%s241 + $0x48] sm:$0x7f]
      %v273 = vld [vmem:[%s241 + $0x68] sm:$0x7f]
      %v274 = vld [vmem:[%s241 + $0x88] sm:$0x7f]
      %v275 = vld [vmem:[%s241 + $0xa8] sm:$0x7f]
      %v276 = vld [vmem:[%s241 + $0xc8] sm:$0x7f]
      %v277 = vmul.f32 %v270, %v184
      %v278 = vmul.f32 %v271, %v184
      %v279 = vmul.f32 %v272, %v184
      %v280 = vmul.f32 %v273, %v184
      %v281 = vmul.f32 %v274, %v184
      %v282 = vmul.f32 %v275, %v184
      %v283 = vmul.f32 %v276, %v184
      %v284 = vadd.f32 %v277, %v197
      %v285 = vadd.f32 %v278, %v197
      %v286 = vadd.f32 %v279, %v197
      %v287 = vadd.f32 %v280, %v197
      %v288 = vadd.f32 %v281, %v197
      %v289 = vadd.f32 %v282, %v197
      %v290 = vadd.f32 %v283, %v197
      %v291 = vmax.f32 %v284, 0.0
      %v292 = vmax.f32 %v285, 0.0
      %v293 = vmax.f32 %v286, 0.0
      %v294 = vmax.f32 %v287, 0.0
      %v295 = vmax.f32 %v288, 0.0
      %v296 = vmax.f32 %v289, 0.0
      %v297 = vmax.f32 %v290, 0.0
      %v298 = vmax.f32 %v206, %v234
      %v299 = vmax.f32 %v207, %v235
      %v300 = vmax.f32 %v208, %v236
      %v301 = vmax.f32 %v209, %v237
      %v302 = vmax.f32 %v210, %v238
      %v303 = vmax.f32 %v211, %v239
      %v304 = vmax.f32 %v212, %v240
      %v305 = vmax.f32 %v263, %v291
      %v306 = vmax.f32 %v264, %v292
      %v307 = vmax.f32 %v265, %v293
      %v308 = vmax.f32 %v266, %v294
      %v309 = vmax.f32 %v267, %v295
      %v310 = vmax.f32 %v268, %v296
      %v311 = vmax.f32 %v269, %v297
      %v312 = vmax.f32 %v298, %v305
      %v313 = vmax.f32 %v299, %v306
      %v314 = vmax.f32 %v300, %v307
      %v315 = vmax.f32 %v301, %v308
      %v316 = vmax.f32 %v302, %v309
      %v317 = vmax.f32 %v303, %v310
      %v318 = vmax.f32 %v304, %v311
      %319 = vst [vmem:[%s170] sm:$0x7f] %v312
      %320 = vst [vmem:[%s170 + $0x8] sm:$0x7f] %v313
      %321 = vst [vmem:[%s170 + $0x10] sm:$0x7f] %v314
      %322 = vst [vmem:[%s170 + $0x18] sm:$0x7f] %v315
      %323 = vst [vmem:[%s170 + $0x20] sm:$0x7f] %v316
      %324 = vst [vmem:[%s170 + $0x28] sm:$0x7f] %v317
      %325 = vst [vmem:[%s170 + $0x30] sm:$0x7f] %v318
      %p326 = scmp.lt.s32.totalorder %s14, 1
      %s327 = scalar_select %p326, %s14, 1
      %s328 = smul.addr %s327, 7
      %s329 = smul.addr %s328, 8
      %s330 = scalar_lea.vmem %s3, %s329
      // Predicated region
      $region33: #{relation_conv_block.3} parent=31 // pred_check
        %p331 = pneg %p100
      $region34: #{relation_conv_block.3} parent=31 // pred_check_branch
        %333 = sbr.rel (%p331) target = $region36
      $region35: #{relation_conv_block.3} parent=31 // pred_region
        _
      $region36: #{relation_conv_block.3} parent=31 // pred_fallthru
        _
    $region32: #{relation_conv_block.3} parent=5 // pred_fallthru
      _
    %p334 = scmp.le.s32.totalorder 2, %s9
    // Predicated region
    $region37: #{relation_conv_block.3} parent=5 // pred_check
      %p335 = pneg %p334
    $region38: #{relation_conv_block.3} parent=5 // pred_check_branch
      %337 = sbr.rel (%p335) target = $region40
    $region39: #{relation_conv_block.3} parent=5 // pred_region
      %s338 = ssub.s32 %s9, 2
      // Predicated region
      $region41: #{relation_conv_block.3} parent=39 // pred_check
        %p339 = pneg %p106
      $region42: #{relation_conv_block.3} parent=39 // pred_check_branch
        %341 = sbr.rel (%p339) target = $region44
      $region43: #{relation_conv_block.3} parent=39 // pred_region
        %p342 = scmp.lt.s32.totalorder %s15, 1
        %s343 = scalar_select %p342, %s15, 1
        %s344 = smul.addr %s343, 7
        %s345 = smul.addr %s344, 8
        %s346 = scalar_lea.vmem %s3, %s345
      $region44: #{relation_conv_block.3} parent=39 // pred_fallthru
        _
    $region40: #{relation_conv_block.3} parent=5 // pred_fallthru
      _
  $region6: #{relation_conv_block.3} parent=0 // loop_footer
    %s13 = sadd.s32 1, %s9
  $region7: #{relation_conv_block.3} parent=0 // loop_footer_branch
    %8 = sbr.rel target = $region3
  $region8: #{relation_conv_block.3} parent=0 // loop_exit
    _

// kernel: relation_conv_block.2
$region0: #{relation_conv_block.2}
  #allocation0 [shape = 'u32[]', space=smem, size = 0x4, offset = 0x4, fixed_abs, tag = 'smem constant byte address 0x4 - core index']
  #allocation1 [shape = 'u32[144,128]{1,0:T(1,128)}', space=vmem, size = 0x12000, scoped, tag = 'internal scratch']
  %s0 = inlined_call_operand.vmem [shape: bf16[2,196,36], index: 0, kind: input, shape index: {}]
  %s1 = inlined_call_operand.vmem [shape: bf16[36,128], index: 1, kind: input, shape index: {}]
  %s2 = inlined_call_operand.vmem [shape: f32[2,196,128], index: 2, kind: output, shape index: {0}]
  %s3 = inlined_call_operand.vmem [shape: f32[2,2,128], index: 3, kind: output, shape index: {1}]
  %4 = xla_tuple %s2, %s3
  %s5 = sld [smem:[#allocation0]]
  $region49: #{relation_conv_block.2} parent=0
    _
  %s7 = ssub.s32 1, %s5
  %s8 = scalar_select 0, %s7, %s5
  loop: start=0, step=1, limit=4
  $region2: #{relation_conv_block.2} parent=0 // loop_pre_header
    _
  $region3: #{relation_conv_block.2} parent=0 // loop_header
    %s10 = sphi 0, %s14
    %p11 = scmp.ge.s32.totalorder %s10, 4
    %s20 = sphi 0, %s22
    %s23 = sphi 0, %s20
    %s24 = sphi 0, %s23
    %s40 = sphi 0, %s24
    %s44 = sphi 0, %s44
    %s46 = sphi 0, %s44
    %s47 = sphi 0, %s46
    %s61 = sphi 0, %s47
    %s67 = sphi 0, %s69
    %s70 = sphi 0, %s67
    %s71 = sphi 0, %s70
    %s87 = sphi 0, %s71
    %s93 = sphi 0, %s95
    %s96 = sphi 0, %s93
    %s97 = sphi 0, %s96
    %s113 = sphi 0, %s97
  $region4: #{relation_conv_block.2} parent=0 // loop_header_branch
    %13 = sbr.rel (%p11) target = $region8
  $region5: #{relation_conv_block.2} parent=0 // loop_body
    %s15 = ssub.s32 %s10, 1
    %s16 = ssub.s32 %s10, 2
    %s17 = sadd.s32 %s10, 1
    %s18 = ssub.s32 %s10, %s17
    %p19 = scmp.eq.s32.totalorder %s18, 0
    %s21 = sadd.s32 %s20, 1
    %s22 = scalar_select %p19, %s20, %s21
    %p25 = pneg %p19
    %p26 = scmp.eq.s32.totalorder %s10, 1
    %p27 = por %p25, %p26
    %p28 = scmp.ne.s32.totalorder %s20, %s23
    %p29 = scmp.eq.s32.totalorder %s10, 0
    %p30 = por %p28, %p29
    %p31 = scmp.ne.s32.totalorder %s20, %s23
    %p32 = scmp.eq.s32.totalorder %s15, 1
    %p33 = por %p31, %p32
    %p34 = scmp.ne.s32.totalorder %s23, %s24
    %p35 = scmp.eq.s32.totalorder %s15, 0
    %p36 = por %p34, %p35
    %p37 = scmp.ne.s32.totalorder %s23, %s24
    %p38 = scmp.eq.s32.totalorder %s16, 1
    %p39 = por %p37, %p38
    %p41 = scmp.ne.s32.totalorder %s24, %s40
    %p42 = scmp.eq.s32.totalorder %s16, 0
    %p43 = por %p41, %p42
    %s45 = sadd.s32 %s44, 1
    %p48 = scmp.eq.s32.totalorder %s10, 1
    %p49 = scmp.ne.s32.totalorder %s44, %s46
    %p50 = scmp.eq.s32.totalorder %s10, 0
    %p51 = por %p49, %p50
    %p52 = scmp.ne.s32.totalorder %s44, %s46
    %p53 = scmp.eq.s32.totalorder %s15, 1
    %p54 = por %p52, %p53
    %p55 = scmp.ne.s32.totalorder %s46, %s47
    %p56 = scmp.eq.s32.totalorder %s15, 0
    %p57 = por %p55, %p56
    %p58 = scmp.ne.s32.totalorder %s46, %s47
    %p59 = scmp.eq.s32.totalorder %s16, 1
    %p60 = por %p58, %p59
    %p62 = scmp.ne.s32.totalorder %s47, %s61
    %p63 = scmp.eq.s32.totalorder %s16, 0
    %p64 = por %p62, %p63
    %s65 = ssub.s32 %s10, %s17
    %p66 = scmp.eq.s32.totalorder %s65, 0
    %s68 = sadd.s32 %s67, 1
    %s69 = scalar_select %p66, %s67, %s68
    %p72 = pneg %p66
    %p73 = scmp.eq.s32.totalorder %s10, 1
    %p74 = por %p72, %p73
    %p75 = scmp.ne.s32.totalorder %s67, %s70
    %p76 = scmp.eq.s32.totalorder %s10, 0
    %p77 = por %p75, %p76
    %p78 = scmp.ne.s32.totalorder %s67, %s70
    %p79 = scmp.eq.s32.totalorder %s15, 1
    %p80 = por %p78, %p79
    %p81 = scmp.ne.s32.totalorder %s70, %s71
    %p82 = scmp.eq.s32.totalorder %s15, 0
    %p83 = por %p81, %p82
    %p84 = scmp.ne.s32.totalorder %s70, %s71
    %p85 = scmp.eq.s32.totalorder %s16, 1
    %p86 = por %p84, %p85
    %p88 = scmp.ne.s32.totalorder %s71, %s87
    %p89 = scmp.eq.s32.totalorder %s16, 0
    %p90 = por %p88, %p89
    %s91 = ssub.s32 %s10, %s17
    %p92 = scmp.eq.s32.totalorder %s91, 0
    %s94 = sadd.s32 %s93, 1
    %s95 = scalar_select %p92, %s93, %s94
    %p98 = pneg %p92
    %p99 = scmp.eq.s32.totalorder %s10, 1
    %p100 = por %p98, %p99
    %p101 = scmp.ne.s32.totalorder %s93, %s96
    %p102 = scmp.eq.s32.totalorder %s10, 0
    %p103 = por %p101, %p102
    %p104 = scmp.ne.s32.totalorder %s93, %s96
    %p105 = scmp.eq.s32.totalorder %s15, 1
    %p106 = por %p104, %p105
    %p107 = scmp.ne.s32.totalorder %s96, %s97
    %p108 = scmp.eq.s32.totalorder %s15, 0
    %p109 = por %p107, %p108
    %p110 = scmp.ne.s32.totalorder %s96, %s97
    %p111 = scmp.eq.s32.totalorder %s16, 1
    %p112 = por %p110, %p111
    %p114 = scmp.ne.s32.totalorder %s97, %s113
    %p115 = scmp.eq.s32.totalorder %s16, 0
    %p116 = por %p114, %p115
    %p117 = scmp.le.s32.totalorder 1, %s10
    %p118 = scmp.lt.s32.totalorder %s10, 3
    %p119 = pnand %p117, %p118
    %p120 = pneg %p119
    // Predicated region
    $region9: #{relation_conv_block.2} parent=5 // pred_check
      _
    $region10: #{relation_conv_block.2} parent=5 // pred_check_branch
      %122 = sbr.rel (%p119) target = $region12
    $region11: #{relation_conv_block.2} parent=5 // pred_region
      %s123 = ssub.s32 %s10, 1
      // Predicated region
      $region13: #{relation_conv_block.2} parent=11 // pred_check
        %p124 = pneg %p57
      $region14: #{relation_conv_block.2} parent=11 // pred_check_branch
        %126 = sbr.rel (%p124) target = $region16
      $region15: #{relation_conv_block.2} parent=11 // pred_region
        _
      $region16: #{relation_conv_block.2} parent=11 // pred_fallthru
        _
    $region12: #{relation_conv_block.2} parent=5 // pred_fallthru
      _
    %p127 = scmp.lt.s32.totalorder %s10, 2
    // Predicated region
    $region17: #{relation_conv_block.2} parent=5 // pred_check
      %p128 = pneg %p127
    $region18: #{relation_conv_block.2} parent=5 // pred_check_branch
      %130 = sbr.rel (%p128) target = $region20
    $region19: #{relation_conv_block.2} parent=5 // pred_region
      // Predicated region
      $region21: #{relation_conv_block.2} parent=19 // pred_check
        %p131 = pneg %p30
      $region22: #{relation_conv_block.2} parent=19 // pred_check_branch
        %133 = sbr.rel (%p131) target = $region24
      $region23: #{relation_conv_block.2} parent=19 // pred_region
        %p134 = scmp.lt.s32.totalorder %s10, 1
        %s135 = scalar_select %p134, %s10, 1
        %s136 = smul.addr %s135, 25
        %s137 = smul.addr %s136, 4
        %s138 = scalar_lea.vmem %s0, %s137
      $region24: #{relation_conv_block.2} parent=19 // pred_fallthru
        _
    $region20: #{relation_conv_block.2} parent=5 // pred_fallthru
      _
    %p139 = scmp.le.s32.totalorder 1, %s10
    %p140 = scmp.lt.s32.totalorder %s10, 3
    %p141 = pnand %p139, %p140
    %p142 = pneg %p141
    // Predicated region
    $region25: #{relation_conv_block.2} parent=5 // pred_check
      _
    $region26: #{relation_conv_block.2} parent=5 // pred_check_branch
      %144 = sbr.rel (%p141) target = $region28
    $region27: #{relation_conv_block.2} parent=5 // pred_region
      %s145 = ssub.s32 %s10, 1
      %p146 = scmp.lt.s32.totalorder %s15, 1
      %s147 = scalar_select %p146, %s15, 1
      %s148 = smul.addr %s147, 25
      %s149 = smul.addr %s148, 4
      %s150 = scalar_lea.vmem %s0, %s149
      %p151 = pneg %p36
      %p152 = pneg %p33
      %p153 = pneg %p57
      %p154 = pneg %p54
      %p155 = pneg %p83
      %p156 = pneg %p80
      %p157 = scmp.lt.s32.totalorder %s15, 1
      %s158 = scalar_select %p157, %s15, 1
      %s159 = smul.addr %s158, 25
      %s160 = smul.addr %s159, 8
      %s161 = scalar_lea.vmem %s2, %s160
      %p162 = pneg %p109
      %p163 = pneg %p106
      %p164 = scmp.lt.s32.totalorder %s15, 1
      %s165 = scalar_select %p164, %s15, 1
      %s166 = smul.addr %s165, 2
      %s167 = scalar_lea.vmem %s3, %s166
      %p168 = scmp.lt.s32.totalorder %s15, 1
      %s169 = scalar_select %p168, %s15, 1
      %s170 = smul.addr %s169, 25
      %s171 = smul.addr %s170, 4
      %s172 = scalar_lea.vmem %s0, %s171
      %p173 = scmp.lt.s32.totalorder %s15, 1
      %s174 = scalar_select %p173, %s15, 1
      %s175 = smul.addr %s174, 25
      %s176 = smul.addr %s175, 8
      %s177 = scalar_lea.vmem %s2, %s176
      %p178 = scmp.lt.s32.totalorder %s15, 1
      %s179 = scalar_select %p178, %s15, 1
      %s180 = smul.addr %s179, 2
      %s181 = scalar_lea.vmem %s3, %s180
      %v183 = vld [vmem:[%s172] sm:$0xf]
      %v184 = vld [vmem:[%s172 + $0x4] sm:$0xf]
      %v185 = vld [vmem:[%s172 + $0x8] sm:$0xf]
      %v186 = vld [vmem:[%s172 + $0xc] sm:$0xf]
      %v187 = vld [vmem:[%s172 + $0x10] sm:$0xf]
      %v188 = vld [vmem:[%s172 + $0x14] sm:$0xf]
      %v189 = vld [vmem:[%s172 + $0x18] sm:$0xf]
      %v190 = vld [vmem:[%s172 + $0x1c] sm:$0xf]
      %v191 = vld [vmem:[%s172 + $0x20] sm:$0xf]
      %v192 = vld [vmem:[%s172 + $0x24] sm:$0xf]
      %v193 = vld [vmem:[%s172 + $0x28] sm:$0xf]
      %v194 = vld [vmem:[%s172 + $0x2c] sm:$0xf]
      %v195 = vld [vmem:[%s172 + $0x30] sm:$0xf]
      %v196 = vld [vmem:[%s172 + $0x34] sm:$0xf]
      %v197 = vld [vmem:[%s172 + $0x38] sm:$0xf]
      %v198 = vld [vmem:[%s172 + $0x3c] sm:$0xf]
      %v199 = vld [vmem:[%s172 + $0x40] sm:$0xf]
      %v200 = vld [vmem:[%s172 + $0x44] sm:$0xf]
      %v201 = vld [vmem:[%s172 + $0x48] sm:$0xf]
      %v202 = vld [vmem:[%s172 + $0x4c] sm:$0xf]
      %v203 = vld [vmem:[%s172 + $0x50] sm:$0xf]
      %v204 = vld [vmem:[%s172 + $0x54] sm:$0xf]
      %v205 = vld [vmem:[%s172 + $0x58] sm:$0xf]
      %v206 = vld [vmem:[%s172 + $0x5c] sm:$0xf]
      %v207 = vld [vmem:[%s172 + $0x60] sm:$0x3]
      %v208 = vld [vmem:[%s1] sm:$0xf]
      %v209 = vld [vmem:[%s1 + $0x4] sm:$0xf]
      %v210 = vld [vmem:[%s1 + $0x8] sm:$0xf]
      %v211 = vld [vmem:[%s1 + $0xc] sm:$0xf]
      %v212 = vld [vmem:[%s1 + $0x10] sm:$0x3]
      %v238 = vunpack.c.l.b16 %v183
      %v239 = vunpack.c.l.b16 %v184
      %v240 = vunpack.c.l.b16 %v185
      %v241 = vunpack.c.l.b16 %v186
      %v242 = vunpack.c.l.b16 %v187
      %v243 = vunpack.c.l.b16 %v188
      %v244 = vunpack.c.l.b16 %v189
      %v245 = vunpack.c.l.b16 %v190
      %v246 = vunpack.c.l.b16 %v191
      %v247 = vunpack.c.l.b16 %v192
      %v248 = vunpack.c.l.b16 %v193
      %v249 = vunpack.c.l.b16 %v194
      %v250 = vunpack.c.l.b16 %v195
      %v251 = vunpack.c.l.b16 %v196
      %v252 = vunpack.c.l.b16 %v197
      %v253 = vunpack.c.l.b16 %v198
      %v254 = vunpack.c.l.b16 %v199
      %v255 = vunpack.c.l.b16 %v200
      %v256 = vunpack.c.l.b16 %v201
      %v257 = vunpack.c.l.b16 %v202
      %v258 = vunpack.c.l.b16 %v203
      %v259 = vunpack.c.l.b16 %v204
      %v260 = vunpack.c.l.b16 %v205
      %v261 = vunpack.c.l.b16 %v206
      %v262 = vunpack.c.l.b16 %v207
      %v263 = vpack.c.b16 %v239, %v238
      %v264 = vpack.c.b16 %v241, %v240
      %v265 = vpack.c.b16 %v243, %v242
      %v266 = vpack.c.b16 %v245, %v244
      %v267 = vpack.c.b16 %v247, %v246
      %v268 = vpack.c.b16 %v249, %v248
      %v269 = vpack.c.b16 %v251, %v250
      %v270 = vpack.c.b16 %v253, %v252
      %v271 = vpack.c.b16 %v255, %v254
      %v272 = vpack.c.b16 %v257, %v256
      %v273 = vpack.c.b16 %v259, %v258
      %v274 = vpack.c.b16 %v261, %v260
      %v275 = vpack.c.b16 %v262, %v262
      %v281 = vunpack.c.l.b16 %v208
      %v282 = vunpack.c.l.b16 %v209
      %v283 = vunpack.c.l.b16 %v210
      %v284 = vunpack.c.l.b16 %v211
      %v285 = vunpack.c.l.b16 %v212
      %v286 = vpack.c.b16 %v282, %v281
      %v287 = vpack.c.b16 %v284, %v283
      %v288 = vpack.c.b16 %v285, %v285
      %vm291 = vcmask 293888
      %v293 = vsel %vm291, %v263, 0
      %v296 = vsel %vm291, %v264, 0
      %v299 = vsel %vm291, %v265, 0
      %v302 = vsel %vm291, %v266, 0
      %v305 = vsel %vm291, %v267, 0
      %v308 = vsel %vm291, %v268, 0
      %v311 = vsel %vm291, %v269, 0
      %v314 = vsel %vm291, %v270, 0
      %v317 = vsel %vm291, %v271, 0
      %v320 = vsel %vm291, %v272, 0
      %v323 = vsel %vm291, %v273, 0
      %v326 = vsel %vm291, %v274, 0
      %v329 = vsel %vm291, %v275, 0
      %vm331 = vcmask 1041408
      %v333 = vsel %vm331, %v288, 0
      %335 = vmatprep.subr.bf16.mxu0 0
      %336 = vmatpush1.bf16.msra.mxu0 %v286
      %337 = vmatprep.subr.bf16.mxu0 0
      %338 = vmatpush1.bf16.msra.mxu0 %v287
      %339 = vmatprep.subr.bf16.mxu0 0
      %340 = vmatpush1.bf16.msra.mxu0 %v333
      %341 = vmatprep.subr.bf16.mxu0 0
      %342 = vmatpush1.bf16.msra.mxu0 0
      %343 = vmatprep.subr.bf16.mxu0 0
      %344 = vmatpush1.bf16.msra.mxu0 0
      %345 = vmatprep.subr.bf16.mxu0 0
      %346 = vmatpush1.bf16.msra.mxu0 0
      %347 = vmatprep.subr.bf16.mxu0 0
      %348 = vmatpush1.bf16.msra.mxu0 0
      %349 = vmatprep.subr.bf16.mxu0 0
      %350 = vmatpush1.bf16.msra.mxu0 0
      %351 = vmatprep.subr.bf16.mxu0 0
      %352 = vmatpush1.bf16.msra.mxu0 0
      %353 = vmatprep.subr.bf16.mxu0 0
      %354 = vmatpush1.bf16.msra.mxu0 0
      %355 = vmatprep.subr.bf16.mxu0 0
      %356 = vmatpush1.bf16.msra.mxu0 0
      %357 = vmatprep.subr.bf16.mxu0 0
      %358 = vmatpush1.bf16.msra.mxu0 0
      %359 = vmatprep.subr.bf16.mxu0 0
      %360 = vmatpush1.bf16.msra.mxu0 0
      %361 = vmatprep.subr.bf16.mxu0 0
      %362 = vmatpush1.bf16.msra.mxu0 0
      %363 = vmatprep.subr.bf16.mxu0 0
      %364 = vmatpush1.bf16.msra.mxu0 0
      %365 = vmatprep.subr.bf16.mxu0 0
      %366 = vmatpush1.bf16.msra.mxu0 0
      %367 = vmatprep.mubr.bf16.mxu0 0
      %368 = vmatmul.mubr.bf16.gmra.mrb[0].mxu0 %v293
      %v369 = vpop.f32.mrb[0].mxu0
      %v370 = vadd.f32 0.0, %v369
      %v371 = vpop.f32.mrb[0].mxu0
      %v372 = vpop.f32.mrb[0].mxu0
      %v373 = vadd.f32 0.0, %v372
      %v374 = vpop.f32.mrb[0].mxu0
      %375 = vmatprep.mubr.bf16.mxu0 0
      %376 = vmatmul.mubr.bf16.gmra.mrb[0].mxu0 %v296
      %v377 = vpop.f32.mrb[0].mxu0
      %v378 = vadd.f32 0.0, %v377
      %v379 = vpop.f32.mrb[0].mxu0
      %v380 = vpop.f32.mrb[0].mxu0
      %v381 = vadd.f32 0.0, %v380
      %v382 = vpop.f32.mrb[0].mxu0
      %383 = vmatprep.mubr.bf16.mxu0 0
      %384 = vmatmul.mubr.bf16.gmra.mrb[0].mxu0 %v299
      %v385 = vpop.f32.mrb[0].mxu0
      %v386 = vadd.f32 0.0, %v385
      %v387 = vpop.f32.mrb[0].mxu0
      %v388 = vpop.f32.mrb[0].mxu0
      %v389 = vadd.f32 0.0, %v388
      %v390 = vpop.f32.mrb[0].mxu0
      %391 = vmatprep.mubr.bf16.mxu0 0
      %392 = vmatmul.mubr.bf16.gmra.mrb[0].mxu0 %v302
      %v393 = vpop.f32.mrb[0].mxu0
      %v394 = vadd.f32 0.0, %v393
      %v395 = vpop.f32.mrb[0].mxu0
      %v396 = vpop.f32.mrb[0].mxu0
      %v397 = vadd.f32 0.0, %v396
      %v398 = vpop.f32.mrb[0].mxu0
      %399 = vmatprep.mubr.bf16.mxu0 0
      %400 = vmatmul.mubr.bf16.gmra.mrb[0].mxu0 %v305
      %v401 = vpop.f32.mrb[0].mxu0
      %v402 = vadd.f32 0.0, %v401
      %v403 = vpop.f32.mrb[0].mxu0
      %v404 = vpop.f32.mrb[0].mxu0
      %v405 = vadd.f32 0.0, %v404
      %v406 = vpop.f32.mrb[0].mxu0
      %407 = vmatprep.mubr.bf16.mxu0 0
      %408 = vmatmul.mubr.bf16.gmra.mrb[0].mxu0 %v308
      %v409 = vpop.f32.mrb[0].mxu0
      %v410 = vadd.f32 0.0, %v409
      %v411 = vpop.f32.mrb[0].mxu0
      %v412 = vpop.f32.mrb[0].mxu0
      %v413 = vadd.f32 0.0, %v412
      %v414 = vpop.f32.mrb[0].mxu0
      %415 = vmatprep.mubr.bf16.mxu0 0
      %416 = vmatmul.mubr.bf16.gmra.mrb[0].mxu0 %v311
      %v417 = vpop.f32.mrb[0].mxu0
      %v418 = vadd.f32 0.0, %v417
      %v419 = vpop.f32.mrb[0].mxu0
      %v420 = vpop.f32.mrb[0].mxu0
      %v421 = vadd.f32 0.0, %v420
      %v422 = vpop.f32.mrb[0].mxu0
      %423 = vmatprep.mubr.bf16.mxu0 0
      %424 = vmatmul.mubr.bf16.gmra.mrb[0].mxu0 %v314
      %v425 = vpop.f32.mrb[0].mxu0
      %v426 = vadd.f32 0.0, %v425
      %v427 = vpop.f32.mrb[0].mxu0
      %v428 = vpop.f32.mrb[0].mxu0
      %v429 = vadd.f32 0.0, %v428
      %v430 = vpop.f32.mrb[0].mxu0
      %431 = vmatprep.mubr.bf16.mxu0 0
      %432 = vmatmul.mubr.bf16.gmra.mrb[0].mxu0 %v317
      %v433 = vpop.f32.mrb[0].mxu0
      %v434 = vadd.f32 0.0, %v433
      %v435 = vpop.f32.mrb[0].mxu0
      %v436 = vpop.f32.mrb[0].mxu0
      %v437 = vadd.f32 0.0, %v436
      %v438 = vpop.f32.mrb[0].mxu0
      %439 = vmatprep.mubr.bf16.mxu0 0
      %440 = vmatmul.mubr.bf16.gmra.mrb[0].mxu0 %v320
      %v441 = vpop.f32.mrb[0].mxu0
      %v442 = vadd.f32 0.0, %v441
      %v443 = vpop.f32.mrb[0].mxu0
      %v444 = vpop.f32.mrb[0].mxu0
      %v445 = vadd.f32 0.0, %v444
      %v446 = vpop.f32.mrb[0].mxu0
      %447 = vmatprep.mubr.bf16.mxu0 0
      %448 = vmatmul.mubr.bf16.gmra.mrb[0].mxu0 %v323
      %v449 = vpop.f32.mrb[0].mxu0
      %v450 = vadd.f32 0.0, %v449
      %v451 = vpop.f32.mrb[0].mxu0
      %v452 = vpop.f32.mrb[0].mxu0
      %v453 = vadd.f32 0.0, %v452
      %v454 = vpop.f32.mrb[0].mxu0
      %455 = vmatprep.mubr.bf16.mxu0 0
      %456 = vmatmul.mubr.bf16.gmra.mrb[0].mxu0 %v326
      %v457 = vpop.f32.mrb[0].mxu0
      %v458 = vadd.f32 0.0, %v457
      %v459 = vpop.f32.mrb[0].mxu0
      %v460 = vpop.f32.mrb[0].mxu0
      %v461 = vadd.f32 0.0, %v460
      %v462 = vpop.f32.mrb[0].mxu0
      %463 = vmatprep.mubr.bf16.mxu0 0
      %464 = vmatmul.mubr.bf16.gmra.mrb[0].mxu0 %v329
      %v465 = vpop.f32.mrb[0].mxu0
      %v466 = vadd.f32 0.0, %v465
      %v467 = vpop.f32.mrb[0].mxu0
      %v468 = vpop.f32.mrb[0].mxu0
      %v469 = vpop.f32.mrb[0].mxu0
      %470 = vdwg.mxu0
      %471 = vst [vmem:[%s177] sm:$0xff] %v370
      %472 = vst [vmem:[%s177 + $0x8] sm:$0xff] %v373
      %473 = vst [vmem:[%s177 + $0x10] sm:$0xff] %v378
      %474 = vst [vmem:[%s177 + $0x18] sm:$0xff] %v381
      %475 = vst [vmem:[%s177 + $0x20] sm:$0xff] %v386
      %476 = vst [vmem:[%s177 + $0x28] sm:$0xff] %v389
      %477 = vst [vmem:[%s177 + $0x30] sm:$0xff] %v394
      %478 = vst [vmem:[%s177 + $0x38] sm:$0xff] %v397
      %479 = vst [vmem:[%s177 + $0x40] sm:$0xff] %v402
      %480 = vst [vmem:[%s177 + $0x48] sm:$0xff] %v405
      %481 = vst [vmem:[%s177 + $0x50] sm:$0xff] %v410
      %482 = vst [vmem:[%s177 + $0x58] sm:$0xff] %v413
      %483 = vst [vmem:[%s177 + $0x60] sm:$0xff] %v418
      %484 = vst [vmem:[%s177 + $0x68] sm:$0xff] %v421
      %485 = vst [vmem:[%s177 + $0x70] sm:$0xff] %v426
      %486 = vst [vmem:[%s177 + $0x78] sm:$0xff] %v429
      %487 = vst [vmem:[%s177 + $0x80] sm:$0xff] %v434
      %488 = vst [vmem:[%s177 + $0x88] sm:$0xff] %v437
      %489 = vst [vmem:[%s177 + $0x90] sm:$0xff] %v442
      %490 = vst [vmem:[%s177 + $0x98] sm:$0xff] %v445
      %491 = vst [vmem:[%s177 + $0xa0] sm:$0xff] %v450
      %492 = vst [vmem:[%s177 + $0xa8] sm:$0xff] %v453
      %493 = vst [vmem:[%s177 + $0xb0] sm:$0xff] %v458
      %494 = vst [vmem:[%s177 + $0xb8] sm:$0xff] %v461
      %495 = vst [vmem:[%s177 + $0xc0] sm:$0xf] %v466
      %v496 = vadd.f32 %v370, %v373
      %v497 = vadd.f32 %v496, %v378
      %v498 = vadd.f32 %v497, %v381
      %v499 = vadd.f32 %v498, %v386
      %v500 = vadd.f32 %v499, %v389
      %v501 = vadd.f32 %v500, %v394
      %v502 = vadd.f32 %v501, %v397
      %v503 = vadd.f32 %v502, %v402
      %v504 = vadd.f32 %v503, %v405
      %v505 = vadd.f32 %v504, %v410
      %v506 = vadd.f32 %v505, %v413
      %v507 = vadd.f32 %v506, %v418
      %v508 = vadd.f32 %v507, %v421
      %v509 = vadd.f32 %v508, %v426
      %v510 = vadd.f32 %v509, %v429
      %v511 = vadd.f32 %v510, %v434
      %v512 = vadd.f32 %v511, %v437
      %v513 = vadd.f32 %v512, %v442
      %v514 = vadd.f32 %v513, %v445
      %v515 = vadd.f32 %v514, %v450
      %v516 = vadd.f32 %v515, %v453
      %v517 = vadd.f32 %v516, %v458
      %v518 = vadd.f32 %v517, %v461
      %vm519 = vcmask 1043456
      %v520 = vsel %vm519, %v466, 0.0
      %v521 = vadd.f32 %v518, %v520
      %v522 = vrot.slane %v521, 4
      %v523 = vadd.f32 %v521, %v522
      %v524 = vrot.slane %v523, 2
      %v525 = vadd.f32 %v523, %v524
      %v526 = vrot.slane %v525, 1
      %v527 = vadd.f32 %v525, %v526
      %528 = vst [vmem:[%s181] sm:$0x1] %v527
      %v529 = vmul.f32 %v370, %v370
      %v530 = vmul.f32 %v373, %v373
      %v531 = vmul.f32 %v378, %v378
      %v532 = vmul.f32 %v381, %v381
      %v533 = vmul.f32 %v386, %v386
      %v534 = vmul.f32 %v389, %v389
      %v535 = vmul.f32 %v394, %v394
      %v536 = vmul.f32 %v397, %v397
      %v537 = vmul.f32 %v402, %v402
      %v538 = vmul.f32 %v405, %v405
      %v539 = vmul.f32 %v410, %v410
      %v540 = vmul.f32 %v413, %v413
      %v541 = vmul.f32 %v418, %v418
      %v542 = vmul.f32 %v421, %v421
      %v543 = vmul.f32 %v426, %v426
      %v544 = vmul.f32 %v429, %v429
      %v545 = vmul.f32 %v434, %v434
      %v546 = vmul.f32 %v437, %v437
      %v547 = vmul.f32 %v442, %v442
      %v548 = vmul.f32 %v445, %v445
      %v549 = vmul.f32 %v450, %v450
      %v550 = vmul.f32 %v453, %v453
      %v551 = vmul.f32 %v458, %v458
      %v552 = vmul.f32 %v461, %v461
      %v553 = vmul.f32 %v466, %v466
      %v554 = vadd.f32 %v529, %v530
      %v555 = vadd.f32 %v554, %v531
      %v556 = vadd.f32 %v555, %v532
      %v557 = vadd.f32 %v556, %v533
      %v558 = vadd.f32 %v557, %v534
      %v559 = vadd.f32 %v558, %v535
      %v560 = vadd.f32 %v559, %v536
      %v561 = vadd.f32 %v560, %v537
      %v562 = vadd.f32 %v561, %v538
      %v563 = vadd.f32 %v562, %v539
      %v564 = vadd.f32 %v563, %v540
      %v565 = vadd.f32 %v564, %v541
      %v566 = vadd.f32 %v565, %v542
      %v567 = vadd.f32 %v566, %v543
      %v568 = vadd.f32 %v567, %v544
      %v569 = vadd.f32 %v568, %v545
      %v570 = vadd.f32 %v569, %v546
      %v571 = vadd.f32 %v570, %v547
      %v572 = vadd.f32 %v571, %v548
      %v573 = vadd.f32 %v572, %v549
      %v574 = vadd.f32 %v573, %v550
      %v575 = vadd.f32 %v574, %v551
      %v576 = vadd.f32 %v575, %v552
      %v577 = vsel %vm519, %v553, 0.0
      %v578 = vadd.f32 %v576, %v577
      %v579 = vrot.slane %v578, 4
      %v580 = vadd.f32 %v578, %v579
      %v581 = vrot.slane %v580, 2
      %v582 = vadd.f32 %v580, %v581
      %v583 = vrot.slane %v582, 1
      %v584 = vadd.f32 %v582, %v583
      %585 = vst [vmem:[%s181 + $0x1] sm:$0x1] %v584
      %p586 = scmp.lt.s32.totalorder %s15, 1
      %s587 = scalar_select %p586, %s15, 1
      %s588 = smul.addr %s587, 25
      %s589 = smul.addr %s588, 8
      %s590 = scalar_lea.vmem %s2, %s589
      %p591 = scmp.lt.s32.totalorder %s15, 1
      %s592 = scalar_select %p591, %s15, 1
      %s593 = smul.addr %s592, 2
      %s594 = scalar_lea.vmem %s3, %s593
      // Predicated region
      $region29: #{relation_conv_block.2} parent=27 // pred_check
        %p595 = pneg %p80
      $region30: #{relation_conv_block.2} parent=27 // pred_check_branch
        %597 = sbr.rel (%p595) target = $region32
      $region31: #{relation_conv_block.2} parent=27 // pred_region
        _
      $region32: #{relation_conv_block.2} parent=27 // pred_fallthru
        _
      // Predicated region
      $region33: #{relation_conv_block.2} parent=27 // pred_check
        %p598 = pneg %p106
      $region34: #{relation_conv_block.2} parent=27 // pred_check_branch
        %600 = sbr.rel (%p598) target = $region36
      $region35: #{relation_conv_block.2} parent=27 // pred_region
        _
      $region36: #{relation_conv_block.2} parent=27 // pred_fallthru
        _
    $region28: #{relation_conv_block.2} parent=5 // pred_fallthru
      _
    %p601 = scmp.le.s32.totalorder 2, %s10
    // Predicated region
    $region37: #{relation_conv_block.2} parent=5 // pred_check
      %p602 = pneg %p601
    $region38: #{relation_conv_block.2} parent=5 // pred_check_branch
      %604 = sbr.rel (%p602) target = $region40
    $region39: #{relation_conv_block.2} parent=5 // pred_region
      %s605 = ssub.s32 %s10, 2
      // Predicated region
      $region41: #{relation_conv_block.2} parent=39 // pred_check
        %p606 = pneg %p86
      $region42: #{relation_conv_block.2} parent=39 // pred_check_branch
        %608 = sbr.rel (%p606) target = $region44
      $region43: #{relation_conv_block.2} parent=39 // pred_region
        %p609 = scmp.lt.s32.totalorder %s16, 1
        %s610 = scalar_select %p609, %s16, 1
        %s611 = smul.addr %s610, 25
        %s612 = smul.addr %s611, 8
        %s613 = scalar_lea.vmem %s2, %s612
      $region44: #{relation_conv_block.2} parent=39 // pred_fallthru
        _
      // Predicated region
      $region45: #{relation_conv_block.2} parent=39 // pred_check
        %p614 = pneg %p112
      $region46: #{relation_conv_block.2} parent=39 // pred_check_branch
        %616 = sbr.rel (%p614) target = $region48
      $region47: #{relation_conv_block.2} parent=39 // pred_region
        %p617 = scmp.lt.s32.totalorder %s16, 1
        %s618 = scalar_select %p617, %s16, 1
        %s619 = smul.addr %s618, 2
        %s620 = scalar_lea.vmem %s3, %s619
      $region48: #{relation_conv_block.2} parent=39 // pred_fallthru
        _
    $region40: #{relation_conv_block.2} parent=5 // pred_fallthru
      _
  $region6: #{relation_conv_block.2} parent=0 // loop_footer
    %s14 = sadd.s32 1, %s10
  $region7: #{relation_conv_block.2} parent=0 // loop_footer_branch
    %9 = sbr.rel target = $region3
  $region8: #{relation_conv_block.2} parent=0 // loop_exit
    _

</llo_original>
